<compile_context>
chip_gen: v7x
topology: tpu7x:2x2x1
jax: 0.10.0
libtpu: 0.0.40
codegen_flags: <defaults>
</compile_context>

<pallas_src>
import jax
import jax.numpy as jnp
from jax.experimental import pallas as pl
from jax.experimental.pallas import tpu as pltpu

_BN_EPS = 1e-5  # PyTorch BatchNorm1d default


def _top_model_kernel(a_ref, b_ref, vec_ref,
                      w1a_ref, w1b_ref, w2_ref, w3_ref, w4_ref,
                      o_ref):
    """Feature-major fused forward.

    a_ref : (Da, Bblk)   b_ref : (Db, Bblk)        activations, batch on lanes
    vec_ref: (20, 6)     columns = [s0 | t0 | b1' | b2' | b3' | b4] (padded)
    w1a/w1b: (20, Da/Db) fc1 weight (BN1-folded), split over the concat halves
    w2/w3  : (10, 20)/(10, 10) BN-folded weights; w4: (10, 10)
    o_ref  : (10, Bblk)  log-probs, classes on sublanes / batch on lanes
    """
    f32 = jnp.float32
    da = a_ref.shape[0]

    a = a_ref[...].astype(f32)
    b = b_ref[...].astype(f32)
    vec = vec_ref[...].astype(f32)                      # (20, 6), tiny

    # Static slices of the packed vector slab (free).
    s0a, t0a = vec[:da, 0:1], vec[:da, 1:2]             # (Da, 1)
    s0b, t0b = vec[da:, 0:1], vec[da:, 1:2]             # (Db, 1)
    b1 = vec[:, 2:3]                                    # (20, 1)
    b2 = vec[:w2_ref.shape[0], 3:4]                     # (10, 1)
    b3 = vec[:w3_ref.shape[0], 4:5]                     # (10, 1)
    b4 = vec[:w4_ref.shape[0], 5:6]                     # (10, 1)

    # Layer 1: BN0 (in-kernel FMA) -> relu -> fc1 (BN1 already folded in).
    # concat(a, b) is implicit: fc1's weight is split by input column.
    ha = jnp.maximum(a * s0a + t0a, 0.0)
    hb = jnp.maximum(b * s0b + t0b, 0.0)
    x = (jnp.dot(w1a_ref[...], ha, preferred_element_type=f32)
         + jnp.dot(w1b_ref[...], hb, preferred_element_type=f32)
         + b1)                                          # (20, Bblk)

    # Layer 2: relu -> fc2 (BN2 folded).
    h = jnp.maximum(x, 0.0)
    x = jnp.dot(w2_ref[...], h, preferred_element_type=f32) + b2   # (10, Bblk)

    # Layer 3: relu -> fc3 (BN3 folded).
    h = jnp.maximum(x, 0.0)
    x = jnp.dot(w3_ref[...], h, preferred_element_type=f32) + b3   # (10, Bblk)

    # Layer 4: relu -> fc4 (no BN after it).
    h = jnp.maximum(x, 0.0)
    x = jnp.dot(w4_ref[...], h, preferred_element_type=f32) + b4   # (10, Bblk)

    # log_softmax over classes (axis 0 = sublanes), numerically stable.
    m = jnp.max(x, axis=0, keepdims=True)               # (1, Bblk)
    z = x - m
    lse = jnp.log(jnp.sum(jnp.exp(z), axis=0, keepdims=True))
    o_ref[...] = (z - lse).astype(o_ref.dtype)


def _fold_bn(gamma, beta, mean, var, eps=_BN_EPS):
    scale = gamma / jnp.sqrt(var + eps)
    shift = beta - mean * scale
    return scale, shift


def prepare_params(params, split_a):
    """One-time conversion from PyTorch layout to kernel layout.

    params: dict with
      'fcN' : (weight (out, in), bias (out,))           N in 1..4
      'bnN' : (gamma, beta, running_mean, running_var)  N in 0..3
    split_a: number of features coming from branch `a` (concat order (a, b)).
    """
    w1, b1 = params["fc1"]
    w2, b2 = params["fc2"]
    w3, b3 = params["fc3"]
    w4, b4 = params["fc4"]
    s0, t0 = _fold_bn(*params["bn0"])
    s1, t1 = _fold_bn(*params["bn1"])
    s2, t2 = _fold_bn(*params["bn2"])
    s3, t3 = _fold_bn(*params["bn3"])

    # Fold the post-linear BNs into the preceding Linear (scale output rows).
    w1f = w1 * s1[:, None]
    b1f = b1 * s1 + t1
    w2f = w2 * s2[:, None]
    b2f = b2 * s2 + t2
    w3f = w3 * s3[:, None]
    b3f = b3 * s3 + t3

    d1 = w1.shape[0]              # 20 = width of the widest vector

    def padcol(v):
        return jnp.pad(v, (0, d1 - v.shape[0]))

    # Packed vector slab (d1, 6): [s0 | t0 | b1' | b2' | b3' | b4] (padded).
    vec = jnp.stack(
        [s0, t0, b1f, padcol(b2f), padcol(b3f), padcol(b4)],
        axis=1).astype(jnp.float32)

    f32 = lambda x: jnp.asarray(x, jnp.float32)
    return dict(
        vec=vec,
        w1a=f32(w1f[:, :split_a]),   # (20, Da) — PyTorch (out, in) layout kept
        w1b=f32(w1f[:, split_a:]),   # (20, Db)
        w2=f32(w2f), w3=f32(w3f), w4=f32(w4),
    )


_PARAM_ORDER = ("vec", "w1a", "w1b", "w2", "w3", "w4")


def top_model_forward(a, b, kparams, *, block_b=8192):
    """a: (B, Da), b: (B, Db) float32 (PyTorch layout); kparams from prepare_params().

    Returns (B, n_classes) log-probabilities. Internally runs feature-major
    (batch-on-lanes); the two transposes are one-time XLA ops outside the kernel.
    """
    B = a.shape[0]
    nc = kparams["w4"].shape[0]
    at = a.T                      # (Da, B)
    bt = b.T                      # (Db, B)
    p = [kparams[k] for k in _PARAM_ORDER]
    out_shape = jax.ShapeDtypeStruct((nc, B), jnp.float32)

    if B < 256:
        # Tiny batch: single gridless invocation, everything VMEM resident.
        vmem = pl.BlockSpec(memory_space=pltpu.MemorySpace.VMEM)
        out = pl.pallas_call(
            _top_model_kernel,
            out_shape=out_shape,
            in_specs=[vmem] * (2 + len(p)),
            out_specs=vmem,
        )(at, bt, *p)
        return out.T

    # Gridded path: tile ONLY the batch (lane) axis; params stay resident.
    # Block must be a multiple of 128 lanes; guarantee >= 2 grid steps so the
    # "parallel" batch axis can be sharded across v7x's two TensorCores.
    block_b = max(128, (block_b // 128) * 128)
    half = 128 * pl.cdiv(pl.cdiv(B, 2), 128)
    block_b = min(block_b, half)
    grid = (pl.cdiv(B, block_b),)

    def colblk(arr):
        return pl.BlockSpec((arr.shape[0], block_b), lambda i: (0, i))

    def full(arr):
        return pl.BlockSpec(arr.shape, lambda i: (0, 0))

    out = pl.pallas_call(
        _top_model_kernel,
        out_shape=out_shape,
        grid=grid,
        in_specs=[colblk(at), colblk(bt)] + [full(x) for x in p],
        out_specs=pl.BlockSpec((nc, block_b), lambda i: (0, i)),
        compiler_params=pltpu.CompilerParams(
            dimension_semantics=("parallel",)),
    )(at, bt, *p)
    return out.T


def _reference_forward(a, b, params, eps=_BN_EPS):
    """Plain-JAX reference of the PyTorch eval-mode forward."""
    def bn(x, g, be, m, v):
        return (x - m) / jnp.sqrt(v + eps) * g + be

    def lin(x, w, bi):
        return x @ w.T + bi

    x = jnp.concatenate([a, b], axis=1)
    x = lin(jax.nn.relu(bn(x, *params["bn0"])), *params["fc1"])
    x = lin(jax.nn.relu(bn(x, *params["bn1"])), *params["fc2"])
    x = lin(jax.nn.relu(bn(x, *params["bn2"])), *params["fc3"])
    x = lin(jax.nn.relu(bn(x, *params["bn3"])), *params["fc4"])
    return jax.nn.log_softmax(x, axis=1)


if __name__ == "__main__":
    key = jax.random.PRNGKey(0)
    keys = jax.random.split(key, 12)
    ki = iter(keys)

    B, DA, DB = 8, 10, 10   # two bottom-model halves of 10 features each

    a = jax.random.normal(next(ki), (B, DA), dtype=jnp.float32)
    b = jax.random.normal(next(ki), (B, DB), dtype=jnp.float32)

    def make_linear(k, out_dim, in_dim):
        kw, kb = jax.random.split(k)
        # kaiming_normal_ (fan_in) as in weights_init
        w = jax.random.normal(kw, (out_dim, in_dim), jnp.float32) * jnp.sqrt(2.0 / in_dim)
        bound = 1.0 / jnp.sqrt(in_dim)
        bias = jax.random.uniform(kb, (out_dim,), jnp.float32, -bound, bound)
        return w, bias

    def make_bn(k, dim):
        kg, kb, km, kv = jax.random.split(k, 4)
        gamma = jax.random.uniform(kg, (dim,), jnp.float32, 0.5, 1.5)
        beta = jax.random.normal(kb, (dim,), jnp.float32) * 0.1
        mean = jax.random.normal(km, (dim,), jnp.float32) * 0.1
        var = jax.random.uniform(kv, (dim,), jnp.float32, 0.5, 1.5)
        return gamma, beta, mean, var

    params = {
        "fc1": make_linear(next(ki), 20, 20),
        "fc2": make_linear(next(ki), 10, 20),
        "fc3": make_linear(next(ki), 10, 10),
        "fc4": make_linear(next(ki), 10, 10),
        "bn0": make_bn(next(ki), 20),
        "bn1": make_bn(next(ki), 20),
        "bn2": make_bn(next(ki), 10),
        "bn3": make_bn(next(ki), 10),
    }

    # One-time parameter prep (BN folding + vector slab packing) off the hot path.
    kparams = prepare_params(params, split_a=DA)

    # Small batch -> gridless path.
    out = top_model_forward(a, b, kparams)
    jax.block_until_ready(out)
    ref = _reference_forward(a, b, params)
    assert out.shape == (B, 10)
    assert jnp.allclose(out, ref, atol=1e-4, rtol=1e-4), (
        f"small-batch max abs err = {jnp.max(jnp.abs(out - ref))}")

    # Larger batch -> gridded path (2 grid steps, ragged last block).
    B2 = 384
    a2 = jax.random.normal(next(ki), (B2, DA), dtype=jnp.float32)
    b2 = jax.random.normal(next(ki), (B2, DB), dtype=jnp.float32)
    out2 = top_model_forward(a2, b2, kparams)
    jax.block_until_ready(out2)
    ref2 = _reference_forward(a2, b2, params)
    assert out2.shape == (B2, 10)
    assert jnp.allclose(out2, ref2, atol=1e-4, rtol=1e-4), (
        f"gridded max abs err = {jnp.max(jnp.abs(out2 - ref2))}")

    print("KERNEL_OK")
</pallas_src>

<mosaic_0001>
module attributes {stable_mosaic.version = 11 : i64} {
  func.func @_top_model_kernel(%arg0: memref<10x8xf32, #tpu.memory_space<vmem>>, %arg1: memref<10x8xf32, #tpu.memory_space<vmem>>, %arg2: memref<20x6xf32, #tpu.memory_space<vmem>>, %arg3: memref<20x10xf32, #tpu.memory_space<vmem>>, %arg4: memref<20x10xf32, #tpu.memory_space<vmem>>, %arg5: memref<10x20xf32, #tpu.memory_space<vmem>>, %arg6: memref<10x10xf32, #tpu.memory_space<vmem>>, %arg7: memref<10x10xf32, #tpu.memory_space<vmem>>, %arg8: memref<10x8xf32, #tpu.memory_space<vmem>>) attributes {dimension_semantics = [], scalar_prefetch = 0 : i64, scratch_operands = 0 : i64, tpu.core_type = #tpu.core_type<tc>} {
    %c0 = arith.constant 0 : index
    %c0_0 = arith.constant 0 : index
    %0 = vector.load %arg0[%c0, %c0_0] : memref<10x8xf32, #tpu.memory_space<vmem>>, vector<10x8xf32>
    %c0_1 = arith.constant 0 : index
    %c0_2 = arith.constant 0 : index
    %1 = vector.load %arg1[%c0_1, %c0_2] : memref<10x8xf32, #tpu.memory_space<vmem>>, vector<10x8xf32>
    %c0_3 = arith.constant 0 : index
    %c0_4 = arith.constant 0 : index
    %2 = vector.load %arg2[%c0_3, %c0_4] : memref<20x6xf32, #tpu.memory_space<vmem>>, vector<20x6xf32>
    %3 = vector.extract_strided_slice %2 {offsets = [0, 0], sizes = [10, 1], strides = [1, 1]} : vector<20x6xf32> to vector<10x1xf32>
    %4 = vector.extract_strided_slice %2 {offsets = [0, 1], sizes = [10, 1], strides = [1, 1]} : vector<20x6xf32> to vector<10x1xf32>
    %5 = vector.extract_strided_slice %2 {offsets = [10, 0], sizes = [10, 1], strides = [1, 1]} : vector<20x6xf32> to vector<10x1xf32>
    %6 = vector.extract_strided_slice %2 {offsets = [10, 1], sizes = [10, 1], strides = [1, 1]} : vector<20x6xf32> to vector<10x1xf32>
    %7 = vector.extract_strided_slice %2 {offsets = [0, 2], sizes = [20, 1], strides = [1, 1]} : vector<20x6xf32> to vector<20x1xf32>
    %8 = vector.extract_strided_slice %2 {offsets = [0, 3], sizes = [10, 1], strides = [1, 1]} : vector<20x6xf32> to vector<10x1xf32>
    %9 = vector.extract_strided_slice %2 {offsets = [0, 4], sizes = [10, 1], strides = [1, 1]} : vector<20x6xf32> to vector<10x1xf32>
    %10 = vector.extract_strided_slice %2 {offsets = [0, 5], sizes = [10, 1], strides = [1, 1]} : vector<20x6xf32> to vector<10x1xf32>
    %11 = vector.broadcast %3 : vector<10x1xf32> to vector<10x8xf32>
    %12 = arith.mulf %0, %11 : vector<10x8xf32>
    %13 = vector.broadcast %4 : vector<10x1xf32> to vector<10x8xf32>
    %14 = arith.addf %12, %13 : vector<10x8xf32>
    %cst = arith.constant 0.000000e+00 : f32
    %15 = vector.broadcast %cst : f32 to vector<10x8xf32>
    %16 = arith.maximumf %14, %15 : vector<10x8xf32>
    %17 = vector.broadcast %5 : vector<10x1xf32> to vector<10x8xf32>
    %18 = arith.mulf %1, %17 : vector<10x8xf32>
    %19 = vector.broadcast %6 : vector<10x1xf32> to vector<10x8xf32>
    %20 = arith.addf %18, %19 : vector<10x8xf32>
    %cst_5 = arith.constant 0.000000e+00 : f32
    %21 = vector.broadcast %cst_5 : f32 to vector<10x8xf32>
    %22 = arith.maximumf %20, %21 : vector<10x8xf32>
    %c0_6 = arith.constant 0 : index
    %c0_7 = arith.constant 0 : index
    %23 = vector.load %arg3[%c0_6, %c0_7] : memref<20x10xf32, #tpu.memory_space<vmem>>, vector<20x10xf32>
    %cst_8 = arith.constant dense<0.000000e+00> : vector<20x8xf32>
    %24 = tpu.matmul %23, %16, %cst_8 {dimension_numbers = #tpu.dot_dimension_numbers<[1], [0], [0], [1], [0, 0, 1, 1], [], []>} : vector<20x10xf32>, vector<10x8xf32>, vector<20x8xf32> -> vector<20x8xf32>
    %c0_9 = arith.constant 0 : index
    %c0_10 = arith.constant 0 : index
    %25 = vector.load %arg4[%c0_9, %c0_10] : memref<20x10xf32, #tpu.memory_space<vmem>>, vector<20x10xf32>
    %cst_11 = arith.constant dense<0.000000e+00> : vector<20x8xf32>
    %26 = tpu.matmul %25, %22, %cst_11 {dimension_numbers = #tpu.dot_dimension_numbers<[1], [0], [0], [1], [0, 0, 1, 1], [], []>} : vector<20x10xf32>, vector<10x8xf32>, vector<20x8xf32> -> vector<20x8xf32>
    %27 = arith.addf %24, %26 : vector<20x8xf32>
    %28 = vector.broadcast %7 : vector<20x1xf32> to vector<20x8xf32>
    %29 = arith.addf %27, %28 : vector<20x8xf32>
    %cst_12 = arith.constant 0.000000e+00 : f32
    %30 = vector.broadcast %cst_12 : f32 to vector<20x8xf32>
    %31 = arith.maximumf %29, %30 : vector<20x8xf32>
    %c0_13 = arith.constant 0 : index
    %c0_14 = arith.constant 0 : index
    %32 = vector.load %arg5[%c0_13, %c0_14] : memref<10x20xf32, #tpu.memory_space<vmem>>, vector<10x20xf32>
    %cst_15 = arith.constant dense<0.000000e+00> : vector<10x8xf32>
    %33 = tpu.matmul %32, %31, %cst_15 {dimension_numbers = #tpu.dot_dimension_numbers<[1], [0], [0], [1], [0, 0, 1, 1], [], []>} : vector<10x20xf32>, vector<20x8xf32>, vector<10x8xf32> -> vector<10x8xf32>
    %34 = vector.broadcast %8 : vector<10x1xf32> to vector<10x8xf32>
    %35 = arith.addf %33, %34 : vector<10x8xf32>
    %cst_16 = arith.constant 0.000000e+00 : f32
    %36 = vector.broadcast %cst_16 : f32 to vector<10x8xf32>
    %37 = arith.maximumf %35, %36 : vector<10x8xf32>
    %c0_17 = arith.constant 0 : index
    %c0_18 = arith.constant 0 : index
    %38 = vector.load %arg6[%c0_17, %c0_18] : memref<10x10xf32, #tpu.memory_space<vmem>>, vector<10x10xf32>
    %cst_19 = arith.constant dense<0.000000e+00> : vector<10x8xf32>
    %39 = tpu.matmul %38, %37, %cst_19 {dimension_numbers = #tpu.dot_dimension_numbers<[1], [0], [0], [1], [0, 0, 1, 1], [], []>} : vector<10x10xf32>, vector<10x8xf32>, vector<10x8xf32> -> vector<10x8xf32>
    %40 = vector.broadcast %9 : vector<10x1xf32> to vector<10x8xf32>
    %41 = arith.addf %39, %40 : vector<10x8xf32>
    %cst_20 = arith.constant 0.000000e+00 : f32
    %42 = vector.broadcast %cst_20 : f32 to vector<10x8xf32>
    %43 = arith.maximumf %41, %42 : vector<10x8xf32>
    %c0_21 = arith.constant 0 : index
    %c0_22 = arith.constant 0 : index
    %44 = vector.load %arg7[%c0_21, %c0_22] : memref<10x10xf32, #tpu.memory_space<vmem>>, vector<10x10xf32>
    %cst_23 = arith.constant dense<0.000000e+00> : vector<10x8xf32>
    %45 = tpu.matmul %44, %43, %cst_23 {dimension_numbers = #tpu.dot_dimension_numbers<[1], [0], [0], [1], [0, 0, 1, 1], [], []>} : vector<10x10xf32>, vector<10x8xf32>, vector<10x8xf32> -> vector<10x8xf32>
    %46 = vector.broadcast %10 : vector<10x1xf32> to vector<10x8xf32>
    %47 = arith.addf %45, %46 : vector<10x8xf32>
    %cst_24 = arith.constant dense<0xFF800000> : vector<8xf32>
    %48 = vector.multi_reduction <maximumf>, %47, %cst_24 [0] : vector<10x8xf32> to vector<8xf32>
    %49 = vector.shape_cast %48 : vector<8xf32> to vector<1x8xf32>
    %50 = vector.broadcast %49 : vector<1x8xf32> to vector<10x8xf32>
    %51 = arith.subf %47, %50 : vector<10x8xf32>
    %52 = math.exp %51 : vector<10x8xf32>
    %cst_25 = arith.constant dense<0.000000e+00> : vector<8xf32>
    %53 = vector.multi_reduction <add>, %52, %cst_25 [0] : vector<10x8xf32> to vector<8xf32>
    %54 = vector.shape_cast %53 : vector<8xf32> to vector<1x8xf32>
    %55 = math.log %54 : vector<1x8xf32>
    %56 = vector.broadcast %55 : vector<1x8xf32> to vector<10x8xf32>
    %57 = arith.subf %51, %56 : vector<10x8xf32>
    %c0_26 = arith.constant 0 : index
    %c0_27 = arith.constant 0 : index
    %58 = vector.load %arg8[%c0_26, %c0_27] : memref<10x8xf32, #tpu.memory_space<vmem>>, vector<10x8xf32>
    tpu.vector_store %arg8[%c0_26, %c0_27], %57 {strides = array<i32>} : memref<10x8xf32, #tpu.memory_space<vmem>>, vector<10x8xf32>,
    return
  }
}

</mosaic_0001>

<llo_original>
// kernel: tpu_custom_call.1
$region0: #{tpu_custom_call.1}
  #allocation0 [shape = 'u32[]', space=smem, size = 0x4, offset = 0x4, fixed_abs, tag = 'smem constant byte address 0x4 - core index']
  #allocation1 [shape = 'u32[144,128]{1,0:T(1,128)}', space=vmem, size = 0x12000, scoped, tag = 'internal scratch']
  %s0 = inlined_call_operand.vmem [shape: f32[10,8], index: 0, kind: input, shape index: {}]
  %s1 = inlined_call_operand.vmem [shape: f32[10,8], index: 1, kind: input, shape index: {}]
  %s2 = inlined_call_operand.vmem [shape: f32[20,6], index: 2, kind: input, shape index: {}]
  %s3 = inlined_call_operand.vmem [shape: f32[20,10], index: 3, kind: input, shape index: {}]
  %s4 = inlined_call_operand.vmem [shape: f32[20,10], index: 4, kind: input, shape index: {}]
  %s5 = inlined_call_operand.vmem [shape: f32[10,20], index: 5, kind: input, shape index: {}]
  %s6 = inlined_call_operand.vmem [shape: f32[10,10], index: 6, kind: input, shape index: {}]
  %s7 = inlined_call_operand.vmem [shape: f32[10,10], index: 7, kind: input, shape index: {}]
  %s8 = inlined_call_operand.vmem [shape: f32[10,8], index: 8, kind: output, shape index: {}]
  %s9 = sld [smem:[#allocation0]]
  $region42: #{tpu_custom_call.1} parent=0
    _
  %s11 = ssub.s32 1, %s9
  %s12 = scalar_select 0, %s11, %s9
  // Predicated region
  $region2: #{tpu_custom_call.1} parent=0 // pred_check
    _
  $region3: #{tpu_custom_call.1} parent=0 // pred_check_branch
    %14 = sbr.rel (0) target = $region5
  $region4: #{tpu_custom_call.1} parent=0 // pred_region
    _
  $region5: #{tpu_custom_call.1} parent=0 // pred_fallthru
    _
  // Predicated region
  $region6: #{tpu_custom_call.1} parent=0 // pred_check
    _
  $region7: #{tpu_custom_call.1} parent=0 // pred_check_branch
    %16 = sbr.rel (0) target = $region9
  $region8: #{tpu_custom_call.1} parent=0 // pred_region
    _
  $region9: #{tpu_custom_call.1} parent=0 // pred_fallthru
    _
  // Predicated region
  $region10: #{tpu_custom_call.1} parent=0 // pred_check
    _
  $region11: #{tpu_custom_call.1} parent=0 // pred_check_branch
    %18 = sbr.rel (0) target = $region13
  $region12: #{tpu_custom_call.1} parent=0 // pred_region
    _
  $region13: #{tpu_custom_call.1} parent=0 // pred_fallthru
    _
  // Predicated region
  $region14: #{tpu_custom_call.1} parent=0 // pred_check
    _
  $region15: #{tpu_custom_call.1} parent=0 // pred_check_branch
    %20 = sbr.rel (0) target = $region17
  $region16: #{tpu_custom_call.1} parent=0 // pred_region
    _
  $region17: #{tpu_custom_call.1} parent=0 // pred_fallthru
    _
  // Predicated region
  $region18: #{tpu_custom_call.1} parent=0 // pred_check
    _
  $region19: #{tpu_custom_call.1} parent=0 // pred_check_branch
    %22 = sbr.rel (0) target = $region21
  $region20: #{tpu_custom_call.1} parent=0 // pred_region
    _
  $region21: #{tpu_custom_call.1} parent=0 // pred_fallthru
    _
  // Predicated region
  $region22: #{tpu_custom_call.1} parent=0 // pred_check
    _
  $region23: #{tpu_custom_call.1} parent=0 // pred_check_branch
    %24 = sbr.rel (0) target = $region25
  $region24: #{tpu_custom_call.1} parent=0 // pred_region
    _
  $region25: #{tpu_custom_call.1} parent=0 // pred_fallthru
    _
  // Predicated region
  $region26: #{tpu_custom_call.1} parent=0 // pred_check
    _
  $region27: #{tpu_custom_call.1} parent=0 // pred_check_branch
    %26 = sbr.rel (0) target = $region29
  $region28: #{tpu_custom_call.1} parent=0 // pred_region
    _
  $region29: #{tpu_custom_call.1} parent=0 // pred_fallthru
    _
  // Predicated region
  $region30: #{tpu_custom_call.1} parent=0 // pred_check
    _
  $region31: #{tpu_custom_call.1} parent=0 // pred_check_branch
    %28 = sbr.rel (0) target = $region33
  $region32: #{tpu_custom_call.1} parent=0 // pred_region
    _
  $region33: #{tpu_custom_call.1} parent=0 // pred_fallthru
    _
  %v29 = vld [vmem:[%s0] sm:$0xff]
  %v30 = vld [vmem:[%s0 + $0x8] sm:$0x3]
  %v31 = vld [vmem:[%s1] sm:$0xff]
  %v32 = vld [vmem:[%s1 + $0x8] sm:$0x3]
  %v33 = vld [vmem:[%s2] sm:$0xff]
  %v34 = vld [vmem:[%s2 + $0x8] sm:$0xff]
  %v35 = vld [vmem:[%s2 + $0x10] sm:$0xf]
  %37 = vset.pattern.permute.xlu0 0
  %38 = vperm.xlu0 %37, %v33
  %v39 = vpop.permute.xlu0 %38
  %42 = vset.pattern.permute.xlu0 0
  %43 = vperm.xlu0 %42, %v34
  %v44 = vpop.permute.xlu0 %43
  %v46 = vmul.f32 %v29, %v39
  %v47 = vmul.f32 %v30, %v44
  %48 = vset.pattern.permute.xlu0 1
  %49 = vperm.xlu0 %48, %v33
  %v50 = vpop.permute.xlu0 %49
  %52 = vset.pattern.permute.xlu0 1
  %53 = vperm.xlu0 %52, %v34
  %v54 = vpop.permute.xlu0 %53
  %v56 = vadd.f32 %v46, %v50
  %v57 = vadd.f32 %v47, %v54
  %v58 = vmax.f32 %v56, 0.0
  %v59 = vmax.f32 %v57, 0.0
  %61 = vset.pattern.permute.xlu0 0
  %62 = vperm.xlu0 %61, %v35
  %v63 = vpop.permute.xlu0 %62
  %vm64 = vcmask 1045504
  %v65 = vrot.slane %v44, 2
  %v66 = vrot.slane %v63, 2
  %v67 = vsel %vm64, %v65, %v66
  %v70 = vmul.f32 %v31, %v67
  %v71 = vmul.f32 %v32, %v66
  %72 = vset.pattern.permute.xlu0 1
  %73 = vperm.xlu0 %72, %v35
  %v74 = vpop.permute.xlu0 %73
  %v75 = vrot.slane %v54, 2
  %v76 = vrot.slane %v74, 2
  %v77 = vsel %vm64, %v75, %v76
  %v80 = vadd.f32 %v70, %v77
  %v81 = vadd.f32 %v71, %v76
  %v82 = vmax.f32 %v80, 0.0
  %v83 = vmax.f32 %v81, 0.0
  %v84 = vld [vmem:[%s3] sm:$0xff]
  %v85 = vld [vmem:[%s3 + $0x8] sm:$0xff]
  %v86 = vld [vmem:[%s3 + $0x10] sm:$0xf]
  %v87 = vld [vmem:[%s4] sm:$0xff]
  %v88 = vld [vmem:[%s4 + $0x8] sm:$0xff]
  %v89 = vld [vmem:[%s4 + $0x10] sm:$0xf]
  %vm90 = vcmask 80896
  %v92 = vsel %vm90, %v87, 0
  %v95 = vsel %vm90, %v88, 0
  %v98 = vsel %vm90, %v89, 0
  %vm100 = vcmask 1041408
  %v102 = vsel %vm100, %v83, 0
  %104 = vmatprep.subr.mxu0 0.0
  %105 = vmatpush1.msra.mxu0 %v82
  %106 = vmatprep.subr.mxu0 0.0
  %107 = vmatpush1.msra.mxu0 %v102
  %108 = vmatprep.subr.mxu0 0.0
  %109 = vmatpush1.msra.mxu0 0.0
  %110 = vmatprep.subr.mxu0 0.0
  %111 = vmatpush1.msra.mxu0 0.0
  %112 = vmatprep.subr.mxu0 0.0
  %113 = vmatpush1.msra.mxu0 0.0
  %114 = vmatprep.subr.mxu0 0.0
  %115 = vmatpush1.msra.mxu0 0.0
  %116 = vmatprep.subr.mxu0 0.0
  %117 = vmatpush1.msra.mxu0 0.0
  %118 = vmatprep.subr.mxu0 0.0
  %119 = vmatpush1.msra.mxu0 0.0
  %120 = vmatprep.subr.mxu0 0.0
  %121 = vmatpush1.msra.mxu0 0.0
  %122 = vmatprep.subr.mxu0 0.0
  %123 = vmatpush1.msra.mxu0 0.0
  %124 = vmatprep.subr.mxu0 0.0
  %125 = vmatpush1.msra.mxu0 0.0
  %126 = vmatprep.subr.mxu0 0.0
  %127 = vmatpush1.msra.mxu0 0.0
  %128 = vmatprep.subr.mxu0 0.0
  %129 = vmatpush1.msra.mxu0 0.0
  %130 = vmatprep.subr.mxu0 0.0
  %131 = vmatpush1.msra.mxu0 0.0
  %132 = vmatprep.subr.mxu0 0.0
  %133 = vmatpush1.msra.mxu0 0.0
  %134 = vmatprep.subr.mxu0 0.0
  %135 = vmatpush1.msra.mxu0 0.0
  %136 = vmatprep.subr.mxu0 0.0
  %137 = vmatpush1.msra.mxu0 0.0
  %138 = vmatprep.subr.mxu0 0.0
  %139 = vmatpush1.msra.mxu0 0.0
  %140 = vmatprep.subr.mxu0 0.0
  %141 = vmatpush1.msra.mxu0 0.0
  %142 = vmatprep.subr.mxu0 0.0
  %143 = vmatpush1.msra.mxu0 0.0
  %144 = vmatprep.subr.mxu0 0.0
  %145 = vmatpush1.msra.mxu0 0.0
  %146 = vmatprep.subr.mxu0 0.0
  %147 = vmatpush1.msra.mxu0 0.0
  %148 = vmatprep.subr.mxu0 0.0
  %149 = vmatpush1.msra.mxu0 0.0
  %150 = vmatprep.subr.mxu0 0.0
  %151 = vmatpush1.msra.mxu0 0.0
  %152 = vmatprep.subr.mxu0 0.0
  %153 = vmatpush1.msra.mxu0 0.0
  %154 = vmatprep.subr.mxu0 0.0
  %155 = vmatpush1.msra.mxu0 0.0
  %156 = vmatprep.subr.mxu0 0.0
  %157 = vmatpush1.msra.mxu0 0.0
  %158 = vmatprep.subr.mxu0 0.0
  %159 = vmatpush1.msra.mxu0 0.0
  %160 = vmatprep.subr.mxu0 0.0
  %161 = vmatpush1.msra.mxu0 0.0
  %162 = vmatprep.subr.mxu0 0.0
  %163 = vmatpush1.msra.mxu0 0.0
  %164 = vmatprep.subr.mxu0 0.0
  %165 = vmatpush1.msra.mxu0 0.0
  %166 = vmatprep.subr.mxu0 0.0
  %167 = vmatpush1.msra.mxu0 0.0
  %168 = vmatprep.mubr.f32.mxu0 0.0
  %169 = vmatmul.mubr.f32.gmra.mrb[0].mxu0 %v92
  %v170 = vpop.f32.mrb[0].mxu0
  %v171 = vadd.f32 0.0, %v170
  %v172 = vpop.f32.mrb[0].mxu0
  %173 = vmatprep.mubr.f32.mxu0 0.0
  %174 = vmatmul.mubr.f32.gmra.mrb[0].mxu0 %v95
  %v175 = vpop.f32.mrb[0].mxu0
  %v176 = vadd.f32 0.0, %v175
  %v177 = vpop.f32.mrb[0].mxu0
  %178 = vmatprep.mubr.f32.mxu0 0.0
  %179 = vmatmul.mubr.f32.gmra.mrb[0].mxu0 %v98
  %v180 = vpop.f32.mrb[0].mxu0
  %v181 = vadd.f32 0.0, %v180
  %v182 = vpop.f32.mrb[0].mxu0
  %183 = vdwg.mxu0
  %v185 = vsel %vm90, %v84, 0
  %v188 = vsel %vm90, %v85, 0
  %v191 = vsel %vm90, %v86, 0
  %v194 = vsel %vm100, %v59, 0
  %196 = vmatprep.subr.mxu0 0.0
  %197 = vmatpush1.msra.mxu0 %v58
  %198 = vmatprep.subr.mxu0 0.0
  %199 = vmatpush1.msra.mxu0 %v194
  %200 = vmatprep.subr.mxu0 0.0
  %201 = vmatpush1.msra.mxu0 0.0
  %202 = vmatprep.subr.mxu0 0.0
  %203 = vmatpush1.msra.mxu0 0.0
  %204 = vmatprep.subr.mxu0 0.0
  %205 = vmatpush1.msra.mxu0 0.0
  %206 = vmatprep.subr.mxu0 0.0
  %207 = vmatpush1.msra.mxu0 0.0
  %208 = vmatprep.subr.mxu0 0.0
  %209 = vmatpush1.msra.mxu0 0.0
  %210 = vmatprep.subr.mxu0 0.0
  %211 = vmatpush1.msra.mxu0 0.0
  %212 = vmatprep.subr.mxu0 0.0
  %213 = vmatpush1.msra.mxu0 0.0
  %214 = vmatprep.subr.mxu0 0.0
  %215 = vmatpush1.msra.mxu0 0.0
  %216 = vmatprep.subr.mxu0 0.0
  %217 = vmatpush1.msra.mxu0 0.0
  %218 = vmatprep.subr.mxu0 0.0
  %219 = vmatpush1.msra.mxu0 0.0
  %220 = vmatprep.subr.mxu0 0.0
  %221 = vmatpush1.msra.mxu0 0.0
  %222 = vmatprep.subr.mxu0 0.0
  %223 = vmatpush1.msra.mxu0 0.0
  %224 = vmatprep.subr.mxu0 0.0
  %225 = vmatpush1.msra.mxu0 0.0
  %226 = vmatprep.subr.mxu0 0.0
  %227 = vmatpush1.msra.mxu0 0.0
  %228 = vmatprep.subr.mxu0 0.0
  %229 = vmatpush1.msra.mxu0 0.0
  %230 = vmatprep.subr.mxu0 0.0
  %231 = vmatpush1.msra.mxu0 0.0
  %232 = vmatprep.subr.mxu0 0.0
  %233 = vmatpush1.msra.mxu0 0.0
  %234 = vmatprep.subr.mxu0 0.0
  %235 = vmatpush1.msra.mxu0 0.0
  %236 = vmatprep.subr.mxu0 0.0
  %237 = vmatpush1.msra.mxu0 0.0
  %238 = vmatprep.subr.mxu0 0.0
  %239 = vmatpush1.msra.mxu0 0.0
  %240 = vmatprep.subr.mxu0 0.0
  %241 = vmatpush1.msra.mxu0 0.0
  %242 = vmatprep.subr.mxu0 0.0
  %243 = vmatpush1.msra.mxu0 0.0
  %244 = vmatprep.subr.mxu0 0.0
  %245 = vmatpush1.msra.mxu0 0.0
  %246 = vmatprep.subr.mxu0 0.0
  %247 = vmatpush1.msra.mxu0 0.0
  %248 = vmatprep.subr.mxu0 0.0
  %249 = vmatpush1.msra.mxu0 0.0
  %250 = vmatprep.subr.mxu0 0.0
  %251 = vmatpush1.msra.mxu0 0.0
  %252 = vmatprep.subr.mxu0 0.0
  %253 = vmatpush1.msra.mxu0 0.0
  %254 = vmatprep.subr.mxu0 0.0
  %255 = vmatpush1.msra.mxu0 0.0
  %256 = vmatprep.subr.mxu0 0.0
  %257 = vmatpush1.msra.mxu0 0.0
  %258 = vmatprep.subr.mxu0 0.0
  %259 = vmatpush1.msra.mxu0 0.0
  %260 = vmatprep.mubr.f32.mxu0 0.0
  %261 = vmatmul.mubr.f32.gmra.mrb[0].mxu0 %v185
  %v262 = vpop.f32.mrb[0].mxu0
  %v263 = vadd.f32 %v171, %v262
  %v264 = vpop.f32.mrb[0].mxu0
  %265 = vmatprep.mubr.f32.mxu0 0.0
  %266 = vmatmul.mubr.f32.gmra.mrb[0].mxu0 %v188
  %v267 = vpop.f32.mrb[0].mxu0
  %v268 = vadd.f32 %v176, %v267
  %v269 = vpop.f32.mrb[0].mxu0
  %270 = vmatprep.mubr.f32.mxu0 0.0
  %271 = vmatmul.mubr.f32.gmra.mrb[0].mxu0 %v191
  %v272 = vpop.f32.mrb[0].mxu0
  %v273 = vadd.f32 %v181, %v272
  %v274 = vpop.f32.mrb[0].mxu0
  %275 = vdwg.mxu0
  %276 = vset.pattern.permute.xlu0 2
  %277 = vperm.xlu0 %276, %v33
  %v278 = vpop.permute.xlu0 %277
  %280 = vset.pattern.permute.xlu0 2
  %281 = vperm.xlu0 %280, %v34
  %v282 = vpop.permute.xlu0 %281
  %284 = vset.pattern.permute.xlu0 2
  %285 = vperm.xlu0 %284, %v35
  %v286 = vpop.permute.xlu0 %285
  %v288 = vadd.f32 %v263, %v278
  %v289 = vadd.f32 %v268, %v282
  %v290 = vadd.f32 %v273, %v286
  %v291 = vmax.f32 %v288, 0.0
  %v292 = vmax.f32 %v289, 0.0
  %v293 = vmax.f32 %v290, 0.0
  %v294 = vld [vmem:[%s5] sm:$0xff]
  %v295 = vld [vmem:[%s5 + $0x8] sm:$0x3]
  %296 = vset.pattern.permute.xlu0 3
  %297 = vperm.xlu0 %296, %v33
  %v298 = vpop.permute.xlu0 %297
  %300 = vset.pattern.permute.xlu0 3
  %301 = vperm.xlu0 %300, %v34
  %v302 = vpop.permute.xlu0 %301
  %vm304 = vcmask 162816
  %v306 = vsel %vm304, %v294, 0
  %v309 = vsel %vm304, %v295, 0
  %vm311 = vcmask 1043456
  %v313 = vsel %vm311, %v293, 0
  %315 = vmatprep.subr.mxu0 0.0
  %316 = vmatpush1.msra.mxu0 %v291
  %317 = vmatprep.subr.mxu0 0.0
  %318 = vmatpush1.msra.mxu0 %v292
  %319 = vmatprep.subr.mxu0 0.0
  %320 = vmatpush1.msra.mxu0 %v313
  %321 = vmatprep.subr.mxu0 0.0
  %322 = vmatpush1.msra.mxu0 0.0
  %323 = vmatprep.subr.mxu0 0.0
  %324 = vmatpush1.msra.mxu0 0.0
  %325 = vmatprep.subr.mxu0 0.0
  %326 = vmatpush1.msra.mxu0 0.0
  %327 = vmatprep.subr.mxu0 0.0
  %328 = vmatpush1.msra.mxu0 0.0
  %329 = vmatprep.subr.mxu0 0.0
  %330 = vmatpush1.msra.mxu0 0.0
  %331 = vmatprep.subr.mxu0 0.0
  %332 = vmatpush1.msra.mxu0 0.0
  %333 = vmatprep.subr.mxu0 0.0
  %334 = vmatpush1.msra.mxu0 0.0
  %335 = vmatprep.subr.mxu0 0.0
  %336 = vmatpush1.msra.mxu0 0.0
  %337 = vmatprep.subr.mxu0 0.0
  %338 = vmatpush1.msra.mxu0 0.0
  %339 = vmatprep.subr.mxu0 0.0
  %340 = vmatpush1.msra.mxu0 0.0
  %341 = vmatprep.subr.mxu0 0.0
  %342 = vmatpush1.msra.mxu0 0.0
  %343 = vmatprep.subr.mxu0 0.0
  %344 = vmatpush1.msra.mxu0 0.0
  %345 = vmatprep.subr.mxu0 0.0
  %346 = vmatpush1.msra.mxu0 0.0
  %347 = vmatprep.subr.mxu0 0.0
  %348 = vmatpush1.msra.mxu0 0.0
  %349 = vmatprep.subr.mxu0 0.0
  %350 = vmatpush1.msra.mxu0 0.0
  %351 = vmatprep.subr.mxu0 0.0
  %352 = vmatpush1.msra.mxu0 0.0
  %353 = vmatprep.subr.mxu0 0.0
  %354 = vmatpush1.msra.mxu0 0.0
  %355 = vmatprep.subr.mxu0 0.0
  %356 = vmatpush1.msra.mxu0 0.0
  %357 = vmatprep.subr.mxu0 0.0
  %358 = vmatpush1.msra.mxu0 0.0
  %359 = vmatprep.subr.mxu0 0.0
  %360 = vmatpush1.msra.mxu0 0.0
  %361 = vmatprep.subr.mxu0 0.0
  %362 = vmatpush1.msra.mxu0 0.0
  %363 = vmatprep.subr.mxu0 0.0
  %364 = vmatpush1.msra.mxu0 0.0
  %365 = vmatprep.subr.mxu0 0.0
  %366 = vmatpush1.msra.mxu0 0.0
  %367 = vmatprep.subr.mxu0 0.0
  %368 = vmatpush1.msra.mxu0 0.0
  %369 = vmatprep.subr.mxu0 0.0
  %370 = vmatpush1.msra.mxu0 0.0
  %371 = vmatprep.subr.mxu0 0.0
  %372 = vmatpush1.msra.mxu0 0.0
  %373 = vmatprep.subr.mxu0 0.0
  %374 = vmatpush1.msra.mxu0 0.0
  %375 = vmatprep.subr.mxu0 0.0
  %376 = vmatpush1.msra.mxu0 0.0
  %377 = vmatprep.subr.mxu0 0.0
  %378 = vmatpush1.msra.mxu0 0.0
  %379 = vmatprep.mubr.f32.mxu0 0.0
  %380 = vmatmul.mubr.f32.gmra.mrb[0].mxu0 %v306
  %v381 = vpop.f32.mrb[0].mxu0
  %v382 = vadd.f32 %v298, %v381
  %v383 = vpop.f32.mrb[0].mxu0
  %384 = vmatprep.mubr.f32.mxu0 0.0
  %385 = vmatmul.mubr.f32.gmra.mrb[0].mxu0 %v309
  %v386 = vpop.f32.mrb[0].mxu0
  %v387 = vadd.f32 %v302, %v386
  %v388 = vpop.f32.mrb[0].mxu0
  %389 = vdwg.mxu0
  %v390 = vmax.f32 %v382, 0.0
  %v391 = vmax.f32 %v387, 0.0
  %v392 = vld [vmem:[%s6] sm:$0xff]
  %v393 = vld [vmem:[%s6 + $0x8] sm:$0x3]
  %394 = vset.pattern.permute.xlu0 4
  %395 = vperm.xlu0 %394, %v33
  %v396 = vpop.permute.xlu0 %395
  %398 = vset.pattern.permute.xlu0 4
  %399 = vperm.xlu0 %398, %v34
  %v400 = vpop.permute.xlu0 %399
  %v403 = vsel %vm90, %v392, 0
  %v406 = vsel %vm90, %v393, 0
  %v409 = vsel %vm100, %v391, 0
  %411 = vmatprep.subr.mxu0 0.0
  %412 = vmatpush1.msra.mxu0 %v390
  %413 = vmatprep.subr.mxu0 0.0
  %414 = vmatpush1.msra.mxu0 %v409
  %415 = vmatprep.subr.mxu0 0.0
  %416 = vmatpush1.msra.mxu0 0.0
  %417 = vmatprep.subr.mxu0 0.0
  %418 = vmatpush1.msra.mxu0 0.0
  %419 = vmatprep.subr.mxu0 0.0
  %420 = vmatpush1.msra.mxu0 0.0
  %421 = vmatprep.subr.mxu0 0.0
  %422 = vmatpush1.msra.mxu0 0.0
  %423 = vmatprep.subr.mxu0 0.0
  %424 = vmatpush1.msra.mxu0 0.0
  %425 = vmatprep.subr.mxu0 0.0
  %426 = vmatpush1.msra.mxu0 0.0
  %427 = vmatprep.subr.mxu0 0.0
  %428 = vmatpush1.msra.mxu0 0.0
  %429 = vmatprep.subr.mxu0 0.0
  %430 = vmatpush1.msra.mxu0 0.0
  %431 = vmatprep.subr.mxu0 0.0
  %432 = vmatpush1.msra.mxu0 0.0
  %433 = vmatprep.subr.mxu0 0.0
  %434 = vmatpush1.msra.mxu0 0.0
  %435 = vmatprep.subr.mxu0 0.0
  %436 = vmatpush1.msra.mxu0 0.0
  %437 = vmatprep.subr.mxu0 0.0
  %438 = vmatpush1.msra.mxu0 0.0
  %439 = vmatprep.subr.mxu0 0.0
  %440 = vmatpush1.msra.mxu0 0.0
  %441 = vmatprep.subr.mxu0 0.0
  %442 = vmatpush1.msra.mxu0 0.0
  %443 = vmatprep.subr.mxu0 0.0
  %444 = vmatpush1.msra.mxu0 0.0
  %445 = vmatprep.subr.mxu0 0.0
  %446 = vmatpush1.msra.mxu0 0.0
  %447 = vmatprep.subr.mxu0 0.0
  %448 = vmatpush1.msra.mxu0 0.0
  %449 = vmatprep.subr.mxu0 0.0
  %450 = vmatpush1.msra.mxu0 0.0
  %451 = vmatprep.subr.mxu0 0.0
  %452 = vmatpush1.msra.mxu0 0.0
  %453 = vmatprep.subr.mxu0 0.0
  %454 = vmatpush1.msra.mxu0 0.0
  %455 = vmatprep.subr.mxu0 0.0
  %456 = vmatpush1.msra.mxu0 0.0
  %457 = vmatprep.subr.mxu0 0.0
  %458 = vmatpush1.msra.mxu0 0.0
  %459 = vmatprep.subr.mxu0 0.0
  %460 = vmatpush1.msra.mxu0 0.0
  %461 = vmatprep.subr.mxu0 0.0
  %462 = vmatpush1.msra.mxu0 0.0
  %463 = vmatprep.subr.mxu0 0.0
  %464 = vmatpush1.msra.mxu0 0.0
  %465 = vmatprep.subr.mxu0 0.0
  %466 = vmatpush1.msra.mxu0 0.0
  %467 = vmatprep.subr.mxu0 0.0
  %468 = vmatpush1.msra.mxu0 0.0
  %469 = vmatprep.subr.mxu0 0.0
  %470 = vmatpush1.msra.mxu0 0.0
  %471 = vmatprep.subr.mxu0 0.0
  %472 = vmatpush1.msra.mxu0 0.0
  %473 = vmatprep.subr.mxu0 0.0
  %474 = vmatpush1.msra.mxu0 0.0
  %475 = vmatprep.mubr.f32.mxu0 0.0
  %476 = vmatmul.mubr.f32.gmra.mrb[0].mxu0 %v403
  %v477 = vpop.f32.mrb[0].mxu0
  %v478 = vadd.f32 %v396, %v477
  %v479 = vpop.f32.mrb[0].mxu0
  %480 = vmatprep.mubr.f32.mxu0 0.0
  %481 = vmatmul.mubr.f32.gmra.mrb[0].mxu0 %v406
  %v482 = vpop.f32.mrb[0].mxu0
  %v483 = vadd.f32 %v400, %v482
  %v484 = vpop.f32.mrb[0].mxu0
  %485 = vdwg.mxu0
  %v486 = vmax.f32 %v478, 0.0
  %v487 = vmax.f32 %v483, 0.0
  %v488 = vld [vmem:[%s7] sm:$0xff]
  %v489 = vld [vmem:[%s7 + $0x8] sm:$0x3]
  %490 = vset.pattern.permute.xlu0 5
  %491 = vperm.xlu0 %490, %v33
  %v492 = vpop.permute.xlu0 %491
  %494 = vset.pattern.permute.xlu0 5
  %495 = vperm.xlu0 %494, %v34
  %v496 = vpop.permute.xlu0 %495
  %v499 = vsel %vm90, %v488, 0
  %v502 = vsel %vm90, %v489, 0
  %v505 = vsel %vm100, %v487, 0
  %507 = vmatprep.subr.mxu0 0.0
  %508 = vmatpush1.msra.mxu0 %v486
  %509 = vmatprep.subr.mxu0 0.0
  %510 = vmatpush1.msra.mxu0 %v505
  %511 = vmatprep.subr.mxu0 0.0
  %512 = vmatpush1.msra.mxu0 0.0
  %513 = vmatprep.subr.mxu0 0.0
  %514 = vmatpush1.msra.mxu0 0.0
  %515 = vmatprep.subr.mxu0 0.0
  %516 = vmatpush1.msra.mxu0 0.0
  %517 = vmatprep.subr.mxu0 0.0
  %518 = vmatpush1.msra.mxu0 0.0
  %519 = vmatprep.subr.mxu0 0.0
  %520 = vmatpush1.msra.mxu0 0.0
  %521 = vmatprep.subr.mxu0 0.0
  %522 = vmatpush1.msra.mxu0 0.0
  %523 = vmatprep.subr.mxu0 0.0
  %524 = vmatpush1.msra.mxu0 0.0
  %525 = vmatprep.subr.mxu0 0.0
  %526 = vmatpush1.msra.mxu0 0.0
  %527 = vmatprep.subr.mxu0 0.0
  %528 = vmatpush1.msra.mxu0 0.0
  %529 = vmatprep.subr.mxu0 0.0
  %530 = vmatpush1.msra.mxu0 0.0
  %531 = vmatprep.subr.mxu0 0.0
  %532 = vmatpush1.msra.mxu0 0.0
  %533 = vmatprep.subr.mxu0 0.0
  %534 = vmatpush1.msra.mxu0 0.0
  %535 = vmatprep.subr.mxu0 0.0
  %536 = vmatpush1.msra.mxu0 0.0
  %537 = vmatprep.subr.mxu0 0.0
  %538 = vmatpush1.msra.mxu0 0.0
  %539 = vmatprep.subr.mxu0 0.0
  %540 = vmatpush1.msra.mxu0 0.0
  %541 = vmatprep.subr.mxu0 0.0
  %542 = vmatpush1.msra.mxu0 0.0
  %543 = vmatprep.subr.mxu0 0.0
  %544 = vmatpush1.msra.mxu0 0.0
  %545 = vmatprep.subr.mxu0 0.0
  %546 = vmatpush1.msra.mxu0 0.0
  %547 = vmatprep.subr.mxu0 0.0
  %548 = vmatpush1.msra.mxu0 0.0
  %549 = vmatprep.subr.mxu0 0.0
  %550 = vmatpush1.msra.mxu0 0.0
  %551 = vmatprep.subr.mxu0 0.0
  %552 = vmatpush1.msra.mxu0 0.0
  %553 = vmatprep.subr.mxu0 0.0
  %554 = vmatpush1.msra.mxu0 0.0
  %555 = vmatprep.subr.mxu0 0.0
  %556 = vmatpush1.msra.mxu0 0.0
  %557 = vmatprep.subr.mxu0 0.0
  %558 = vmatpush1.msra.mxu0 0.0
  %559 = vmatprep.subr.mxu0 0.0
  %560 = vmatpush1.msra.mxu0 0.0
  %561 = vmatprep.subr.mxu0 0.0
  %562 = vmatpush1.msra.mxu0 0.0
  %563 = vmatprep.subr.mxu0 0.0
  %564 = vmatpush1.msra.mxu0 0.0
  %565 = vmatprep.subr.mxu0 0.0
  %566 = vmatpush1.msra.mxu0 0.0
  %567 = vmatprep.subr.mxu0 0.0
  %568 = vmatpush1.msra.mxu0 0.0
  %569 = vmatprep.subr.mxu0 0.0
  %570 = vmatpush1.msra.mxu0 0.0
  %571 = vmatprep.mubr.f32.mxu0 0.0
  %572 = vmatmul.mubr.f32.gmra.mrb[0].mxu0 %v499
  %v573 = vpop.f32.mrb[0].mxu0
  %v574 = vadd.f32 %v492, %v573
  %v575 = vpop.f32.mrb[0].mxu0
  %576 = vmatprep.mubr.f32.mxu0 0.0
  %577 = vmatmul.mubr.f32.gmra.mrb[0].mxu0 %v502
  %v578 = vpop.f32.mrb[0].mxu0
  %v579 = vadd.f32 %v496, %v578
  %v580 = vpop.f32.mrb[0].mxu0
  %581 = vdwg.mxu0
  %vm582 = vcmask 64512
  %v583 = vsel %vm582, %v574, -inf
  %vm584 = vcmask 58368
  %v585 = vsel %vm584, %v579, -inf
  %v586 = vmax.f32 %v583, %v585
  %v587 = vrot.slane %v586, 4
  %v588 = vmax.f32 %v586, %v587
  %v589 = vrot.slane %v588, 2
  %v590 = vmax.f32 %v588, %v589
  %v591 = vrot.slane %v590, 1
  %v592 = vmax.f32 %v590, %v591
  %v593 = vsub.f32 %v574, %v592
  %v594 = vsub.f32 %v579, %v592
  %v595 = vmul.f32 %v593, 1.442695
  %v596 = vpow.pop %v595
  %v597 = vmul.f32 %v594, 1.442695
  %v598 = vpow.pop %v597
  %v599 = vsel %vm582, %v596, 0.0
  %v600 = vsel %vm584, %v598, 0.0
  %v601 = vadd.f32 %v599, %v600
  %v602 = vrot.slane %v601, 4
  %v603 = vadd.f32 %v601, %v602
  %v604 = vrot.slane %v603, 2
  %v605 = vadd.f32 %v603, %v604
  %v606 = vrot.slane %v605, 1
  %v607 = vadd.f32 %v605, %v606
  %v608 = vlog2.pop %v607
  %v609 = vmul.f32 %v608, 0.6931472
  %v610 = vsub.f32 %v593, %v609
  %v611 = vsub.f32 %v594, %v609
  %612 = vst.msk [vmem:[%s8] sm:$0xff] %vm582, %v610
  %613 = vst.msk [vmem:[%s8 + $0x8] sm:$0x3] %vm584, %v611
  // Predicated region
  $region34: #{tpu_custom_call.1} parent=0 // pred_check
    _
  $region35: #{tpu_custom_call.1} parent=0 // pred_check_branch
    %615 = sbr.rel (0) target = $region37
  $region36: #{tpu_custom_call.1} parent=0 // pred_region
    _
  $region37: #{tpu_custom_call.1} parent=0 // pred_fallthru
    _
  // Predicated region
  $region38: #{tpu_custom_call.1} parent=0 // pred_check
    _
  $region39: #{tpu_custom_call.1} parent=0 // pred_check_branch
    %617 = sbr.rel (0) target = $region41
  $region40: #{tpu_custom_call.1} parent=0 // pred_region
    _
  $region41: #{tpu_custom_call.1} parent=0 // pred_fallthru
    _

</llo_original>
